<compile_context>
chip_gen: v5e
topology: v5e:2x2
jax: 0.10.0
libtpu: 0.0.40
codegen_flags: <defaults>
</compile_context>

<pallas_src>
import math
import functools

import jax
import jax.numpy as jnp
from jax import lax
from jax.experimental import pallas as pl
from jax.experimental.pallas import tpu as pltpu


def _round_up(n, m):
    return ((n + m - 1) // m) * m


_DIMS_ROWCOL = (((1,), (0,)), ((), ()))  # a @ b
_DIMS_ROWROW = (((1,), (1,)), ((), ()))  # a @ b.T (MXU-native transposed weights)


# ---------------------------------------------------------------------------
# Kernel 1: batch-independent GCN branch -> classifier weights g2 (L_pad, F) bf16
# ---------------------------------------------------------------------------
def gcn_kernel(emb_ref, w_gc1_ref, w_gc2_ref, adj_ref, g2_ref):
    adj = adj_ref[...]                                               # bf16
    s1 = lax.dot_general(emb_ref[...], w_gc1_ref[...],
                         _DIMS_ROWCOL, preferred_element_type=jnp.float32)
    g1 = lax.dot_general(adj, s1.astype(jnp.bfloat16),
                         _DIMS_ROWCOL, preferred_element_type=jnp.float32)
    g1 = jnp.maximum(g1, 0.2 * g1)                                   # LeakyReLU(0.2)
    s2 = lax.dot_general(g1.astype(jnp.bfloat16), w_gc2_ref[...],
                         _DIMS_ROWCOL, preferred_element_type=jnp.float32)
    g2 = lax.dot_general(adj, s2.astype(jnp.bfloat16),
                         _DIMS_ROWCOL, preferred_element_type=jnp.float32)
    g2_ref[...] = g2.astype(jnp.bfloat16)


# ---------------------------------------------------------------------------
# Kernel 2: feature extractor + classifier, tiled over the batch
# ---------------------------------------------------------------------------
def feat_logits_kernel(x_ref, w_fe1_ref, b_fe1_ref, w_fe2_ref, b_fe2_ref,
                       g2_ref, out_ref):
    h = lax.dot_general(x_ref[...], w_fe1_ref[...],
                        _DIMS_ROWCOL, preferred_element_type=jnp.float32)
    h = jnp.maximum(h + b_fe1_ref[...], 0.0)                         # ReLU (f32 VPU)
    feats = lax.dot_general(h.astype(jnp.bfloat16), w_fe2_ref[...],
                            _DIMS_ROWCOL, preferred_element_type=jnp.float32)
    feats = feats + b_fe2_ref[...]

    # logits = feats @ g2.T, contraction over feature_dim; g2 stays untransposed.
    out_ref[...] = lax.dot_general(feats.astype(jnp.bfloat16), g2_ref[...],
                                   _DIMS_ROWROW, preferred_element_type=jnp.float32)


# ---------------------------------------------------------------------------
# Wrapper
# ---------------------------------------------------------------------------
@functools.partial(jax.jit, static_argnames=("batch_tile",))
def mlgcn_forward(x, label_emb, params, *, batch_tile=128):
    B, input_dim = x.shape
    num_labels, embed_dim = label_emb.shape
    feature_dim = params["w_fe2"].shape[1]

    # Lane-dense label axis: pad to a multiple of 128 so the logits store is an
    # unmasked vst. Zero adjacency rows/cols in the pad region keep the math exact.
    L_pad = _round_up(max(num_labels, 128), 128)
    emb_pad = (jnp.zeros((L_pad, embed_dim), jnp.bfloat16)
               .at[:num_labels].set(label_emb.astype(jnp.bfloat16)))
    adj_pad = (jnp.zeros((L_pad, L_pad), jnp.bfloat16)
               .at[:num_labels, :num_labels].set(params["adj"].astype(jnp.bfloat16)))

    # One-time bf16 casts of all matmul operands (done in XLA, not per grid step).
    w_gc1 = params["w_gc1"].astype(jnp.bfloat16)
    w_gc2 = params["w_gc2"].astype(jnp.bfloat16)
    w_fe1 = params["w_fe1"].astype(jnp.bfloat16)
    w_fe2 = params["w_fe2"].astype(jnp.bfloat16)
    b_fe1 = params["b_fe1"].astype(jnp.float32)
    b_fe2 = params["b_fe2"].astype(jnp.float32)

    # ----- stage 1: batch-independent classifier weights g2 (bf16) -----
    g2 = pl.pallas_call(
        gcn_kernel,
        out_shape=jax.ShapeDtypeStruct((L_pad, feature_dim), jnp.bfloat16),
        in_specs=[
            pl.BlockSpec(emb_pad.shape, lambda: (0, 0)),
            pl.BlockSpec(w_gc1.shape, lambda: (0, 0)),
            pl.BlockSpec(w_gc2.shape, lambda: (0, 0)),
            pl.BlockSpec(adj_pad.shape, lambda: (0, 0)),
        ],
        out_specs=pl.BlockSpec((L_pad, feature_dim), lambda: (0, 0)),
    )(emb_pad, w_gc1, w_gc2, adj_pad)

    # ----- stage 2: per-sample features + logits, gridded over the batch -----
    TB = min(batch_tile, _round_up(B, 8))      # sublane-aligned batch tile
    B_pad = _round_up(B, TB)
    x_bf = x.astype(jnp.bfloat16)
    x_pad = (x_bf if B_pad == B
             else jnp.zeros((B_pad, input_dim), jnp.bfloat16).at[:B].set(x_bf))
    nb = B_pad // TB

    logits_pad = pl.pallas_call(
        feat_logits_kernel,
        out_shape=jax.ShapeDtypeStruct((B_pad, L_pad), jnp.float32),
        grid=(nb,),
        in_specs=[
            pl.BlockSpec((TB, input_dim), lambda i: (i, 0)),
            pl.BlockSpec(w_fe1.shape, lambda i: (0, 0)),
            pl.BlockSpec(b_fe1.shape, lambda i: (0, 0)),
            pl.BlockSpec(w_fe2.shape, lambda i: (0, 0)),
            pl.BlockSpec(b_fe2.shape, lambda i: (0, 0)),
            pl.BlockSpec((L_pad, feature_dim), lambda i: (0, 0)),
        ],
        out_specs=pl.BlockSpec((TB, L_pad), lambda i: (i, 0)),
        compiler_params=pltpu.CompilerParams(
            dimension_semantics=("parallel",)),
    )(x_pad, w_fe1, b_fe1, w_fe2, b_fe2, g2)

    return logits_pad[:B, :num_labels]


# ---------------------------------------------------------------------------
# Parameter init mirroring the PyTorch module's shapes / init ranges
# ---------------------------------------------------------------------------
def init_params(key, input_dim, feature_dim, num_labels, label_embed_dim, gc_hidden_dim):
    ks = jax.random.split(key, 6)

    def uniform(k, shape, bound):
        return jax.random.uniform(k, shape, jnp.float32, -bound, bound)

    # nn.Linear default init: U(-1/sqrt(fan_in), 1/sqrt(fan_in)); stored as (in, out).
    w_fe1 = uniform(ks[0], (input_dim, feature_dim), 1.0 / math.sqrt(input_dim))
    b_fe1 = uniform(ks[1], (1, feature_dim), 1.0 / math.sqrt(input_dim))
    w_fe2 = uniform(ks[2], (feature_dim, feature_dim), 1.0 / math.sqrt(feature_dim))
    b_fe2 = uniform(ks[3], (1, feature_dim), 1.0 / math.sqrt(feature_dim))

    # GraphConvolution init: U(-1/sqrt(out_features), 1/sqrt(out_features)).
    w_gc1 = uniform(ks[4], (label_embed_dim, gc_hidden_dim), 1.0 / math.sqrt(gc_hidden_dim))
    w_gc2 = uniform(ks[5], (gc_hidden_dim, feature_dim), 1.0 / math.sqrt(feature_dim))

    # adj=None in the module -> identity matrix parameter.
    adj = jnp.eye(num_labels, dtype=jnp.float32)

    return dict(w_fe1=w_fe1, b_fe1=b_fe1, w_fe2=w_fe2, b_fe2=b_fe2,
                w_gc1=w_gc1, w_gc2=w_gc2, adj=adj)


# ---------------------------------------------------------------------------
# Pure-JAX reference (mirrors the bf16-matmul / f32-accumulate kernel math)
# ---------------------------------------------------------------------------
def reference_forward(x, label_emb, p):
    bf = lambda a: a.astype(jnp.bfloat16)
    mm = lambda a, b: lax.dot_general(bf(a), bf(b), _DIMS_ROWCOL,
                                      preferred_element_type=jnp.float32)
    h = jnp.maximum(mm(x, p["w_fe1"]) + p["b_fe1"], 0.0)
    feats = mm(h, p["w_fe2"]) + p["b_fe2"]
    g1 = mm(p["adj"], mm(label_emb, p["w_gc1"]))
    g1 = jnp.maximum(g1, 0.2 * g1)
    g2 = mm(p["adj"], mm(g1, p["w_gc2"]))
    return lax.dot_general(bf(feats), bf(g2), _DIMS_ROWROW,
                           preferred_element_type=jnp.float32)


if __name__ == "__main__":
    B = 8
    input_dim = 32
    feature_dim = 64
    num_labels = 16
    label_embed_dim = 32
    gc_hidden_dim = 32

    key = jax.random.PRNGKey(0)
    k_x, k_emb, k_p = jax.random.split(key, 3)

    x = jax.random.normal(k_x, (B, input_dim), jnp.float32)
    label_emb = jax.random.normal(k_emb, (num_labels, label_embed_dim), jnp.float32)
    params = init_params(k_p, input_dim, feature_dim, num_labels,
                         label_embed_dim, gc_hidden_dim)

    logits = mlgcn_forward(x, label_emb, params)
    logits = jax.block_until_ready(logits)

    ref = reference_forward(x, label_emb, params)
    assert logits.shape == (B, num_labels)
    assert jnp.allclose(logits, ref, atol=1e-2, rtol=1e-2), "mismatch vs reference"

    print("KERNEL_OK")
</pallas_src>

<mosaic_0001>
module attributes {stable_mosaic.version = 11 : i64} {
  func.func @gcn_kernel(%arg0: memref<128x32xbf16, #tpu.memory_space<vmem>>, %arg1: memref<32x32xbf16, #tpu.memory_space<vmem>>, %arg2: memref<32x64xbf16, #tpu.memory_space<vmem>>, %arg3: memref<128x128xbf16, #tpu.memory_space<vmem>>, %arg4: memref<128x64xbf16, #tpu.memory_space<vmem>>) attributes {dimension_semantics = [], scalar_prefetch = 0 : i64, scratch_operands = 0 : i64, tpu.core_type = #tpu.core_type<tc>} {
    %c0 = arith.constant 0 : index
    %c0_0 = arith.constant 0 : index
    %0 = vector.load %arg3[%c0, %c0_0] : memref<128x128xbf16, #tpu.memory_space<vmem>>, vector<128x128xbf16>
    %c0_1 = arith.constant 0 : index
    %c0_2 = arith.constant 0 : index
    %1 = vector.load %arg0[%c0_1, %c0_2] : memref<128x32xbf16, #tpu.memory_space<vmem>>, vector<128x32xbf16>
    %c0_3 = arith.constant 0 : index
    %c0_4 = arith.constant 0 : index
    %2 = vector.load %arg1[%c0_3, %c0_4] : memref<32x32xbf16, #tpu.memory_space<vmem>>, vector<32x32xbf16>
    %cst = arith.constant dense<0.000000e+00> : vector<128x32xf32>
    %3 = tpu.matmul %1, %2, %cst {dimension_numbers = #tpu.dot_dimension_numbers<[1], [0], [0], [1], [0, 0, 1, 1], [], []>} : vector<128x32xbf16>, vector<32x32xbf16>, vector<128x32xf32> -> vector<128x32xf32>
    %4 = arith.truncf %3 : vector<128x32xf32> to vector<128x32xbf16>
    %cst_5 = arith.constant dense<0.000000e+00> : vector<128x32xf32>
    %5 = tpu.matmul %0, %4, %cst_5 {dimension_numbers = #tpu.dot_dimension_numbers<[1], [0], [0], [1], [0, 0, 1, 1], [], []>} : vector<128x128xbf16>, vector<128x32xbf16>, vector<128x32xf32> -> vector<128x32xf32>
    %cst_6 = arith.constant 2.000000e-01 : f32
    %6 = vector.broadcast %cst_6 : f32 to vector<128x32xf32>
    %7 = arith.mulf %6, %5 : vector<128x32xf32>
    %8 = arith.maximumf %5, %7 : vector<128x32xf32>
    %9 = arith.truncf %8 : vector<128x32xf32> to vector<128x32xbf16>
    %c0_7 = arith.constant 0 : index
    %c0_8 = arith.constant 0 : index
    %10 = vector.load %arg2[%c0_7, %c0_8] : memref<32x64xbf16, #tpu.memory_space<vmem>>, vector<32x64xbf16>
    %cst_9 = arith.constant dense<0.000000e+00> : vector<128x64xf32>
    %11 = tpu.matmul %9, %10, %cst_9 {dimension_numbers = #tpu.dot_dimension_numbers<[1], [0], [0], [1], [0, 0, 1, 1], [], []>} : vector<128x32xbf16>, vector<32x64xbf16>, vector<128x64xf32> -> vector<128x64xf32>
    %12 = arith.truncf %11 : vector<128x64xf32> to vector<128x64xbf16>
    %cst_10 = arith.constant dense<0.000000e+00> : vector<128x64xf32>
    %13 = tpu.matmul %0, %12, %cst_10 {dimension_numbers = #tpu.dot_dimension_numbers<[1], [0], [0], [1], [0, 0, 1, 1], [], []>} : vector<128x128xbf16>, vector<128x64xbf16>, vector<128x64xf32> -> vector<128x64xf32>
    %14 = arith.truncf %13 : vector<128x64xf32> to vector<128x64xbf16>
    %c0_11 = arith.constant 0 : index
    %c0_12 = arith.constant 0 : index
    %15 = vector.load %arg4[%c0_11, %c0_12] : memref<128x64xbf16, #tpu.memory_space<vmem>>, vector<128x64xbf16>
    tpu.vector_store %arg4[%c0_11, %c0_12], %14 {strides = array<i32>} : memref<128x64xbf16, #tpu.memory_space<vmem>>, vector<128x64xbf16>,
    return
  }
}

module attributes {stable_mosaic.version = 11 : i64} {
  func.func @feat_logits_kernel(%arg0: i32, %arg1: memref<8x32xbf16, #tpu.memory_space<vmem>>, %arg2: memref<32x64xbf16, #tpu.memory_space<vmem>>, %arg3: memref<1x64xf32, #tpu.memory_space<vmem>>, %arg4: memref<64x64xbf16, #tpu.memory_space<vmem>>, %arg5: memref<1x64xf32, #tpu.memory_space<vmem>>, %arg6: memref<128x64xbf16, #tpu.memory_space<vmem>>, %arg7: memref<8x128xf32, #tpu.memory_space<vmem>>) attributes {dimension_semantics = [#tpu.dimension_semantics<parallel>], iteration_bounds = array<i64: 1>, scalar_prefetch = 0 : i64, scratch_operands = 0 : i64, tpu.core_type = #tpu.core_type<tc>, window_params = [{transform_indices = @transform_0, window_bounds = array<i64: 8, 32>}, {pipeline_mode = #tpu.pipeline_mode<synchronous>, transform_indices = @transform_1, window_bounds = array<i64: 32, 64>}, {pipeline_mode = #tpu.pipeline_mode<synchronous>, transform_indices = @transform_2, window_bounds = array<i64: 1, 64>}, {pipeline_mode = #tpu.pipeline_mode<synchronous>, transform_indices = @transform_3, window_bounds = array<i64: 64, 64>}, {pipeline_mode = #tpu.pipeline_mode<synchronous>, transform_indices = @transform_4, window_bounds = array<i64: 1, 64>}, {pipeline_mode = #tpu.pipeline_mode<synchronous>, transform_indices = @transform_5, window_bounds = array<i64: 128, 64>}, {transform_indices = @transform_6, window_bounds = array<i64: 8, 128>}]} {
    %c0 = arith.constant 0 : index
    %c0_0 = arith.constant 0 : index
    %0 = vector.load %arg1[%c0, %c0_0] : memref<8x32xbf16, #tpu.memory_space<vmem>>, vector<8x32xbf16>
    %c0_1 = arith.constant 0 : index
    %c0_2 = arith.constant 0 : index
    %1 = vector.load %arg2[%c0_1, %c0_2] : memref<32x64xbf16, #tpu.memory_space<vmem>>, vector<32x64xbf16>
    %cst = arith.constant dense<0.000000e+00> : vector<8x64xf32>
    %2 = tpu.matmul %0, %1, %cst {dimension_numbers = #tpu.dot_dimension_numbers<[1], [0], [0], [1], [0, 0, 1, 1], [], []>} : vector<8x32xbf16>, vector<32x64xbf16>, vector<8x64xf32> -> vector<8x64xf32>
    %c0_3 = arith.constant 0 : index
    %c0_4 = arith.constant 0 : index
    %3 = vector.load %arg3[%c0_3, %c0_4] : memref<1x64xf32, #tpu.memory_space<vmem>>, vector<1x64xf32>
    %4 = vector.broadcast %3 : vector<1x64xf32> to vector<8x64xf32>
    %5 = arith.addf %2, %4 : vector<8x64xf32>
    %cst_5 = arith.constant 0.000000e+00 : f32
    %6 = vector.broadcast %cst_5 : f32 to vector<8x64xf32>
    %7 = arith.maximumf %5, %6 : vector<8x64xf32>
    %8 = arith.truncf %7 : vector<8x64xf32> to vector<8x64xbf16>
    %c0_6 = arith.constant 0 : index
    %c0_7 = arith.constant 0 : index
    %9 = vector.load %arg4[%c0_6, %c0_7] : memref<64x64xbf16, #tpu.memory_space<vmem>>, vector<64x64xbf16>
    %cst_8 = arith.constant dense<0.000000e+00> : vector<8x64xf32>
    %10 = tpu.matmul %8, %9, %cst_8 {dimension_numbers = #tpu.dot_dimension_numbers<[1], [0], [0], [1], [0, 0, 1, 1], [], []>} : vector<8x64xbf16>, vector<64x64xbf16>, vector<8x64xf32> -> vector<8x64xf32>
    %c0_9 = arith.constant 0 : index
    %c0_10 = arith.constant 0 : index
    %11 = vector.load %arg5[%c0_9, %c0_10] : memref<1x64xf32, #tpu.memory_space<vmem>>, vector<1x64xf32>
    %12 = vector.broadcast %11 : vector<1x64xf32> to vector<8x64xf32>
    %13 = arith.addf %10, %12 : vector<8x64xf32>
    %14 = arith.truncf %13 : vector<8x64xf32> to vector<8x64xbf16>
    %c0_11 = arith.constant 0 : index
    %c0_12 = arith.constant 0 : index
    %15 = vector.load %arg6[%c0_11, %c0_12] : memref<128x64xbf16, #tpu.memory_space<vmem>>, vector<128x64xbf16>
    %cst_13 = arith.constant dense<0.000000e+00> : vector<8x128xf32>
    %16 = tpu.matmul %14, %15, %cst_13 {dimension_numbers = #tpu.dot_dimension_numbers<[1], [1], [0], [0], [0, 0, 1, 0], [], []>} : vector<8x64xbf16>, vector<128x64xbf16>, vector<8x128xf32> -> vector<8x128xf32>
    %c0_14 = arith.constant 0 : index
    %c0_15 = arith.constant 0 : index
    %17 = vector.load %arg7[%c0_14, %c0_15] : memref<8x128xf32, #tpu.memory_space<vmem>>, vector<8x128xf32>
    tpu.vector_store %arg7[%c0_14, %c0_15], %16 {strides = array<i32>} : memref<8x128xf32, #tpu.memory_space<vmem>>, vector<8x128xf32>,
    return
  }
  func.func @transform_0(%arg0: i32) -> (i32, i32) {
    %c0_i32 = arith.constant 0 : i32
    %c0_i32_0 = arith.constant 0 : i32
    return %arg0, %c0_i32 : i32, i32
  }
  func.func @transform_1(%arg0: i32) -> (i32, i32) {
    %c0_i32 = arith.constant 0 : i32
    %c0_i32_0 = arith.constant 0 : i32
    %c0_i32_1 = arith.constant 0 : i32
    return %c0_i32, %c0_i32_0 : i32, i32
  }
  func.func @transform_2(%arg0: i32) -> (i32, i32) {
    %c0_i32 = arith.constant 0 : i32
    %c0_i32_0 = arith.constant 0 : i32
    %c0_i32_1 = arith.constant 0 : i32
    return %c0_i32, %c0_i32_0 : i32, i32
  }
  func.func @transform_3(%arg0: i32) -> (i32, i32) {
    %c0_i32 = arith.constant 0 : i32
    %c0_i32_0 = arith.constant 0 : i32
    %c0_i32_1 = arith.constant 0 : i32
    return %c0_i32, %c0_i32_0 : i32, i32
  }
  func.func @transform_4(%arg0: i32) -> (i32, i32) {
    %c0_i32 = arith.constant 0 : i32
    %c0_i32_0 = arith.constant 0 : i32
    %c0_i32_1 = arith.constant 0 : i32
    return %c0_i32, %c0_i32_0 : i32, i32
  }
  func.func @transform_5(%arg0: i32) -> (i32, i32) {
    %c0_i32 = arith.constant 0 : i32
    %c0_i32_0 = arith.constant 0 : i32
    %c0_i32_1 = arith.constant 0 : i32
    return %c0_i32, %c0_i32_0 : i32, i32
  }
  func.func @transform_6(%arg0: i32) -> (i32, i32) {
    %c0_i32 = arith.constant 0 : i32
    %c0_i32_0 = arith.constant 0 : i32
    return %arg0, %c0_i32 : i32, i32
  }
}

</mosaic_0001>

<llo_original>
// kernel: mlgcn_forward.2
$region0: #{mlgcn_forward.2}
  #allocation0 [shape = 'u32[]', space=smem, size = 0x4, offset = 0x4, fixed_abs, tag = 'smem constant byte address 0x4 - core index']
  #allocation1 [shape = 'u32[72,128]{1,0:T(1,128)}', space=vmem, size = 0x9000, scoped, tag = 'internal scratch']
  %s0 = inlined_call_operand.vmem [shape: bf16[128,32], index: 0, kind: input, shape index: {}]
  %s1 = inlined_call_operand.vmem [shape: bf16[32,32], index: 1, kind: input, shape index: {}]
  %s2 = inlined_call_operand.vmem [shape: bf16[32,64], index: 2, kind: input, shape index: {}]
  %s3 = inlined_call_operand.vmem [shape: bf16[128,128], index: 3, kind: input, shape index: {}]
  %s4 = inlined_call_operand.vmem [shape: bf16[128,64], index: 4, kind: output, shape index: {}]
  %s5 = sld [smem:[#allocation0]]
  $region26: #{mlgcn_forward.2} parent=0
    _
  %s7 = ssub.s32 1, %s5
  %s8 = scalar_select 0, %s7, %s5
  // Predicated region
  $region2: #{mlgcn_forward.2} parent=0 // pred_check
    _
  $region3: #{mlgcn_forward.2} parent=0 // pred_check_branch
    %10 = sbr.rel (0) target = $region5
  $region4: #{mlgcn_forward.2} parent=0 // pred_region
    _
  $region5: #{mlgcn_forward.2} parent=0 // pred_fallthru
    _
  // Predicated region
  $region6: #{mlgcn_forward.2} parent=0 // pred_check
    _
  $region7: #{mlgcn_forward.2} parent=0 // pred_check_branch
    %12 = sbr.rel (0) target = $region9
  $region8: #{mlgcn_forward.2} parent=0 // pred_region
    _
  $region9: #{mlgcn_forward.2} parent=0 // pred_fallthru
    _
  // Predicated region
  $region10: #{mlgcn_forward.2} parent=0 // pred_check
    _
  $region11: #{mlgcn_forward.2} parent=0 // pred_check_branch
    %14 = sbr.rel (0) target = $region13
  $region12: #{mlgcn_forward.2} parent=0 // pred_region
    _
  $region13: #{mlgcn_forward.2} parent=0 // pred_fallthru
    _
  // Predicated region
  $region14: #{mlgcn_forward.2} parent=0 // pred_check
    _
  $region15: #{mlgcn_forward.2} parent=0 // pred_check_branch
    %16 = sbr.rel (0) target = $region17
  $region16: #{mlgcn_forward.2} parent=0 // pred_region
    _
  $region17: #{mlgcn_forward.2} parent=0 // pred_fallthru
    _
  %v18 = vld [vmem:[%s3] sm:$0xf]
  %v19 = vld [vmem:[%s3 + $0x4] sm:$0xf]
  %v20 = vld [vmem:[%s3 + $0x8] sm:$0xf]
  %v21 = vld [vmem:[%s3 + $0xc] sm:$0xf]
  %v22 = vld [vmem:[%s3 + $0x10] sm:$0xf]
  %v23 = vld [vmem:[%s3 + $0x14] sm:$0xf]
  %v24 = vld [vmem:[%s3 + $0x18] sm:$0xf]
  %v25 = vld [vmem:[%s3 + $0x1c] sm:$0xf]
  %v26 = vld [vmem:[%s3 + $0x20] sm:$0xf]
  %v27 = vld [vmem:[%s3 + $0x24] sm:$0xf]
  %v28 = vld [vmem:[%s3 + $0x28] sm:$0xf]
  %v29 = vld [vmem:[%s3 + $0x2c] sm:$0xf]
  %v30 = vld [vmem:[%s3 + $0x30] sm:$0xf]
  %v31 = vld [vmem:[%s3 + $0x34] sm:$0xf]
  %v32 = vld [vmem:[%s3 + $0x38] sm:$0xf]
  %v33 = vld [vmem:[%s3 + $0x3c] sm:$0xf]
  %v34 = vld [vmem:[%s0] sm:$0xf]
  %v35 = vld [vmem:[%s0 + $0x4] sm:$0xf]
  %v36 = vld [vmem:[%s0 + $0x8] sm:$0xf]
  %v37 = vld [vmem:[%s0 + $0xc] sm:$0xf]
  %v38 = vld [vmem:[%s0 + $0x10] sm:$0xf]
  %v39 = vld [vmem:[%s0 + $0x14] sm:$0xf]
  %v40 = vld [vmem:[%s0 + $0x18] sm:$0xf]
  %v41 = vld [vmem:[%s0 + $0x1c] sm:$0xf]
  %v42 = vld [vmem:[%s0 + $0x20] sm:$0xf]
  %v43 = vld [vmem:[%s0 + $0x24] sm:$0xf]
  %v44 = vld [vmem:[%s0 + $0x28] sm:$0xf]
  %v45 = vld [vmem:[%s0 + $0x2c] sm:$0xf]
  %v46 = vld [vmem:[%s0 + $0x30] sm:$0xf]
  %v47 = vld [vmem:[%s0 + $0x34] sm:$0xf]
  %v48 = vld [vmem:[%s0 + $0x38] sm:$0xf]
  %v49 = vld [vmem:[%s0 + $0x3c] sm:$0xf]
  %v50 = vld [vmem:[%s1] sm:$0xf]
  %v51 = vld [vmem:[%s1 + $0x4] sm:$0xf]
  %v52 = vld [vmem:[%s1 + $0x8] sm:$0xf]
  %v53 = vld [vmem:[%s1 + $0xc] sm:$0xf]
  %v70 = vunpack.c.l.b16 %v34
  %v71 = vunpack.c.l.b16 %v35
  %v72 = vunpack.c.l.b16 %v36
  %v73 = vunpack.c.l.b16 %v37
  %v74 = vunpack.c.l.b16 %v38
  %v75 = vunpack.c.l.b16 %v39
  %v76 = vunpack.c.l.b16 %v40
  %v77 = vunpack.c.l.b16 %v41
  %v78 = vunpack.c.l.b16 %v42
  %v79 = vunpack.c.l.b16 %v43
  %v80 = vunpack.c.l.b16 %v44
  %v81 = vunpack.c.l.b16 %v45
  %v82 = vunpack.c.l.b16 %v46
  %v83 = vunpack.c.l.b16 %v47
  %v84 = vunpack.c.l.b16 %v48
  %v85 = vunpack.c.l.b16 %v49
  %v86 = vpack.c.b16 %v71, %v70
  %v87 = vpack.c.b16 %v73, %v72
  %v88 = vpack.c.b16 %v75, %v74
  %v89 = vpack.c.b16 %v77, %v76
  %v90 = vpack.c.b16 %v79, %v78
  %v91 = vpack.c.b16 %v81, %v80
  %v92 = vpack.c.b16 %v83, %v82
  %v93 = vpack.c.b16 %v85, %v84
  %v98 = vunpack.c.l.b16 %v50
  %v99 = vunpack.c.l.b16 %v51
  %v100 = vunpack.c.l.b16 %v52
  %v101 = vunpack.c.l.b16 %v53
  %v102 = vpack.c.b16 %v99, %v98
  %v103 = vpack.c.b16 %v101, %v100
  %vm106 = vcmask 261120
  %v108 = vsel %vm106, %v86, 0
  %v111 = vsel %vm106, %v87, 0
  %v114 = vsel %vm106, %v88, 0
  %v117 = vsel %vm106, %v89, 0
  %v120 = vsel %vm106, %v90, 0
  %v123 = vsel %vm106, %v91, 0
  %v126 = vsel %vm106, %v92, 0
  %v129 = vsel %vm106, %v93, 0
  %131 = vmatpush.bf16.msra.mxu0 0
  %132 = vmatpush.bf16.msra.mxu0 0
  %133 = vmatpush.bf16.msra.mxu0 0
  %134 = vmatpush.bf16.msra.mxu0 0
  %135 = vmatpush.bf16.msra.mxu0 0
  %136 = vmatpush.bf16.msra.mxu0 0
  %137 = vmatpush.bf16.msra.mxu0 %v103
  %138 = vmatpush.bf16.msra.mxu0 %v102
  %139 = vmatmul.bf16.gmra.mxu0 %v108
  %v140 = vpop.f32.mrf.mxu0
  %v141 = vadd.f32 0.0, %v140
  %v142 = vpop.f32.mrf.mxu0
  %v143 = vadd.f32 0.0, %v142
  %144 = vmatmul.bf16.gmra.mxu0 %v111
  %v145 = vpop.f32.mrf.mxu0
  %v146 = vadd.f32 0.0, %v145
  %v147 = vpop.f32.mrf.mxu0
  %v148 = vadd.f32 0.0, %v147
  %149 = vmatmul.bf16.gmra.mxu0 %v114
  %v150 = vpop.f32.mrf.mxu0
  %v151 = vadd.f32 0.0, %v150
  %v152 = vpop.f32.mrf.mxu0
  %v153 = vadd.f32 0.0, %v152
  %154 = vmatmul.bf16.gmra.mxu0 %v117
  %v155 = vpop.f32.mrf.mxu0
  %v156 = vadd.f32 0.0, %v155
  %v157 = vpop.f32.mrf.mxu0
  %v158 = vadd.f32 0.0, %v157
  %159 = vmatmul.bf16.gmra.mxu0 %v120
  %v160 = vpop.f32.mrf.mxu0
  %v161 = vadd.f32 0.0, %v160
  %v162 = vpop.f32.mrf.mxu0
  %v163 = vadd.f32 0.0, %v162
  %164 = vmatmul.bf16.gmra.mxu0 %v123
  %v165 = vpop.f32.mrf.mxu0
  %v166 = vadd.f32 0.0, %v165
  %v167 = vpop.f32.mrf.mxu0
  %v168 = vadd.f32 0.0, %v167
  %169 = vmatmul.bf16.gmra.mxu0 %v126
  %v170 = vpop.f32.mrf.mxu0
  %v171 = vadd.f32 0.0, %v170
  %v172 = vpop.f32.mrf.mxu0
  %v173 = vadd.f32 0.0, %v172
  %174 = vmatmul.bf16.gmra.mxu0 %v129
  %v175 = vpop.f32.mrf.mxu0
  %v176 = vadd.f32 0.0, %v175
  %v177 = vpop.f32.mrf.mxu0
  %v178 = vadd.f32 0.0, %v177
  %179 = vdwg.mxu0
  %v180 = vpack.c.bf16 %v143, %v141
  %v181 = vpack.c.bf16 %v148, %v146
  %v182 = vpack.c.bf16 %v153, %v151
  %v183 = vpack.c.bf16 %v158, %v156
  %v184 = vpack.c.bf16 %v163, %v161
  %v185 = vpack.c.bf16 %v168, %v166
  %v186 = vpack.c.bf16 %v173, %v171
  %v187 = vpack.c.bf16 %v178, %v176
  %v204 = vunpack.c.l.b16 %v18
  %v205 = vunpack.c.l.b16 %v19
  %v206 = vunpack.c.l.b16 %v20
  %v207 = vunpack.c.l.b16 %v21
  %v208 = vunpack.c.l.b16 %v22
  %v209 = vunpack.c.l.b16 %v23
  %v210 = vunpack.c.l.b16 %v24
  %v211 = vunpack.c.l.b16 %v25
  %v212 = vunpack.c.l.b16 %v26
  %v213 = vunpack.c.l.b16 %v27
  %v214 = vunpack.c.l.b16 %v28
  %v215 = vunpack.c.l.b16 %v29
  %v216 = vunpack.c.l.b16 %v30
  %v217 = vunpack.c.l.b16 %v31
  %v218 = vunpack.c.l.b16 %v32
  %v219 = vunpack.c.l.b16 %v33
  %v220 = vpack.c.b16 %v205, %v204
  %v221 = vpack.c.b16 %v207, %v206
  %v222 = vpack.c.b16 %v209, %v208
  %v223 = vpack.c.b16 %v211, %v210
  %v224 = vpack.c.b16 %v213, %v212
  %v225 = vpack.c.b16 %v215, %v214
  %v226 = vpack.c.b16 %v217, %v216
  %v227 = vpack.c.b16 %v219, %v218
  %236 = vmatpush.bf16.msra.mxu0 %v187
  %237 = vmatpush.bf16.msra.mxu0 %v186
  %238 = vmatpush.bf16.msra.mxu0 %v185
  %239 = vmatpush.bf16.msra.mxu0 %v184
  %240 = vmatpush.bf16.msra.mxu0 %v183
  %241 = vmatpush.bf16.msra.mxu0 %v182
  %242 = vmatpush.bf16.msra.mxu0 %v181
  %243 = vmatpush.bf16.msra.mxu0 %v180
  %244 = vmatmul.bf16.gmra.mxu0 %v220
  %v245 = vpop.f32.mrf.mxu0
  %v246 = vadd.f32 0.0, %v245
  %v247 = vpop.f32.mrf.mxu0
  %v248 = vadd.f32 0.0, %v247
  %249 = vmatmul.bf16.gmra.mxu0 %v221
  %v250 = vpop.f32.mrf.mxu0
  %v251 = vadd.f32 0.0, %v250
  %v252 = vpop.f32.mrf.mxu0
  %v253 = vadd.f32 0.0, %v252
  %254 = vmatmul.bf16.gmra.mxu0 %v222
  %v255 = vpop.f32.mrf.mxu0
  %v256 = vadd.f32 0.0, %v255
  %v257 = vpop.f32.mrf.mxu0
  %v258 = vadd.f32 0.0, %v257
  %259 = vmatmul.bf16.gmra.mxu0 %v223
  %v260 = vpop.f32.mrf.mxu0
  %v261 = vadd.f32 0.0, %v260
  %v262 = vpop.f32.mrf.mxu0
  %v263 = vadd.f32 0.0, %v262
  %264 = vmatmul.bf16.gmra.mxu0 %v224
  %v265 = vpop.f32.mrf.mxu0
  %v266 = vadd.f32 0.0, %v265
  %v267 = vpop.f32.mrf.mxu0
  %v268 = vadd.f32 0.0, %v267
  %269 = vmatmul.bf16.gmra.mxu0 %v225
  %v270 = vpop.f32.mrf.mxu0
  %v271 = vadd.f32 0.0, %v270
  %v272 = vpop.f32.mrf.mxu0
  %v273 = vadd.f32 0.0, %v272
  %274 = vmatmul.bf16.gmra.mxu0 %v226
  %v275 = vpop.f32.mrf.mxu0
  %v276 = vadd.f32 0.0, %v275
  %v277 = vpop.f32.mrf.mxu0
  %v278 = vadd.f32 0.0, %v277
  %279 = vmatmul.bf16.gmra.mxu0 %v227
  %v280 = vpop.f32.mrf.mxu0
  %v281 = vadd.f32 0.0, %v280
  %v282 = vpop.f32.mrf.mxu0
  %v283 = vadd.f32 0.0, %v282
  %284 = vdwg.mxu0
  %v285 = vmul.f32 %v246, 0.2
  %v286 = vmul.f32 %v248, 0.2
  %v287 = vmul.f32 %v251, 0.2
  %v288 = vmul.f32 %v253, 0.2
  %v289 = vmul.f32 %v256, 0.2
  %v290 = vmul.f32 %v258, 0.2
  %v291 = vmul.f32 %v261, 0.2
  %v292 = vmul.f32 %v263, 0.2
  %v293 = vmul.f32 %v266, 0.2
  %v294 = vmul.f32 %v268, 0.2
  %v295 = vmul.f32 %v271, 0.2
  %v296 = vmul.f32 %v273, 0.2
  %v297 = vmul.f32 %v276, 0.2
  %v298 = vmul.f32 %v278, 0.2
  %v299 = vmul.f32 %v281, 0.2
  %v300 = vmul.f32 %v283, 0.2
  %v301 = vmax.f32 %v246, %v285
  %v302 = vmax.f32 %v248, %v286
  %v303 = vmax.f32 %v251, %v287
  %v304 = vmax.f32 %v253, %v288
  %v305 = vmax.f32 %v256, %v289
  %v306 = vmax.f32 %v258, %v290
  %v307 = vmax.f32 %v261, %v291
  %v308 = vmax.f32 %v263, %v292
  %v309 = vmax.f32 %v266, %v293
  %v310 = vmax.f32 %v268, %v294
  %v311 = vmax.f32 %v271, %v295
  %v312 = vmax.f32 %v273, %v296
  %v313 = vmax.f32 %v276, %v297
  %v314 = vmax.f32 %v278, %v298
  %v315 = vmax.f32 %v281, %v299
  %v316 = vmax.f32 %v283, %v300
  %v317 = vpack.c.bf16 %v302, %v301
  %v318 = vpack.c.bf16 %v304, %v303
  %v319 = vpack.c.bf16 %v306, %v305
  %v320 = vpack.c.bf16 %v308, %v307
  %v321 = vpack.c.bf16 %v310, %v309
  %v322 = vpack.c.bf16 %v312, %v311
  %v323 = vpack.c.bf16 %v314, %v313
  %v324 = vpack.c.bf16 %v316, %v315
  %v325 = vld [vmem:[%s2] sm:$0xf]
  %v326 = vld [vmem:[%s2 + $0x4] sm:$0xf]
  %v327 = vld [vmem:[%s2 + $0x8] sm:$0xf]
  %v328 = vld [vmem:[%s2 + $0xc] sm:$0xf]
  %v333 = vunpack.c.l.b16 %v325
  %v334 = vunpack.c.l.b16 %v326
  %v335 = vunpack.c.l.b16 %v327
  %v336 = vunpack.c.l.b16 %v328
  %v337 = vpack.c.b16 %v334, %v333
  %v338 = vpack.c.b16 %v336, %v335
  %v342 = vsel %vm106, %v317, 0
  %v345 = vsel %vm106, %v318, 0
  %v348 = vsel %vm106, %v319, 0
  %v351 = vsel %vm106, %v320, 0
  %v354 = vsel %vm106, %v321, 0
  %v357 = vsel %vm106, %v322, 0
  %v360 = vsel %vm106, %v323, 0
  %v363 = vsel %vm106, %v324, 0
  %365 = vmatpush.bf16.msra.mxu0 0
  %366 = vmatpush.bf16.msra.mxu0 0
  %367 = vmatpush.bf16.msra.mxu0 0
  %368 = vmatpush.bf16.msra.mxu0 0
  %369 = vmatpush.bf16.msra.mxu0 0
  %370 = vmatpush.bf16.msra.mxu0 0
  %371 = vmatpush.bf16.msra.mxu0 %v338
  %372 = vmatpush.bf16.msra.mxu0 %v337
  %373 = vmatmul.bf16.gmra.mxu0 %v342
  %v374 = vpop.f32.mrf.mxu0
  %v375 = vadd.f32 0.0, %v374
  %v376 = vpop.f32.mrf.mxu0
  %v377 = vadd.f32 0.0, %v376
  %378 = vmatmul.bf16.gmra.mxu0 %v345
  %v379 = vpop.f32.mrf.mxu0
  %v380 = vadd.f32 0.0, %v379
  %v381 = vpop.f32.mrf.mxu0
  %v382 = vadd.f32 0.0, %v381
  %383 = vmatmul.bf16.gmra.mxu0 %v348
  %v384 = vpop.f32.mrf.mxu0
  %v385 = vadd.f32 0.0, %v384
  %v386 = vpop.f32.mrf.mxu0
  %v387 = vadd.f32 0.0, %v386
  %388 = vmatmul.bf16.gmra.mxu0 %v351
  %v389 = vpop.f32.mrf.mxu0
  %v390 = vadd.f32 0.0, %v389
  %v391 = vpop.f32.mrf.mxu0
  %v392 = vadd.f32 0.0, %v391
  %393 = vmatmul.bf16.gmra.mxu0 %v354
  %v394 = vpop.f32.mrf.mxu0
  %v395 = vadd.f32 0.0, %v394
  %v396 = vpop.f32.mrf.mxu0
  %v397 = vadd.f32 0.0, %v396
  %398 = vmatmul.bf16.gmra.mxu0 %v357
  %v399 = vpop.f32.mrf.mxu0
  %v400 = vadd.f32 0.0, %v399
  %v401 = vpop.f32.mrf.mxu0
  %v402 = vadd.f32 0.0, %v401
  %403 = vmatmul.bf16.gmra.mxu0 %v360
  %v404 = vpop.f32.mrf.mxu0
  %v405 = vadd.f32 0.0, %v404
  %v406 = vpop.f32.mrf.mxu0
  %v407 = vadd.f32 0.0, %v406
  %408 = vmatmul.bf16.gmra.mxu0 %v363
  %v409 = vpop.f32.mrf.mxu0
  %v410 = vadd.f32 0.0, %v409
  %v411 = vpop.f32.mrf.mxu0
  %v412 = vadd.f32 0.0, %v411
  %413 = vdwg.mxu0
  %v414 = vpack.c.bf16 %v377, %v375
  %v415 = vpack.c.bf16 %v382, %v380
  %v416 = vpack.c.bf16 %v387, %v385
  %v417 = vpack.c.bf16 %v392, %v390
  %v418 = vpack.c.bf16 %v397, %v395
  %v419 = vpack.c.bf16 %v402, %v400
  %v420 = vpack.c.bf16 %v407, %v405
  %v421 = vpack.c.bf16 %v412, %v410
  %422 = vmatpush.bf16.msra.mxu0 %v421
  %423 = vmatpush.bf16.msra.mxu0 %v420
  %424 = vmatpush.bf16.msra.mxu0 %v419
  %425 = vmatpush.bf16.msra.mxu0 %v418
  %426 = vmatpush.bf16.msra.mxu0 %v417
  %427 = vmatpush.bf16.msra.mxu0 %v416
  %428 = vmatpush.bf16.msra.mxu0 %v415
  %429 = vmatpush.bf16.msra.mxu0 %v414
  %430 = vmatmul.bf16.gmra.mxu0 %v220
  %v431 = vpop.f32.mrf.mxu0
  %v432 = vadd.f32 0.0, %v431
  %v433 = vpop.f32.mrf.mxu0
  %v434 = vadd.f32 0.0, %v433
  %435 = vmatmul.bf16.gmra.mxu0 %v221
  %v436 = vpop.f32.mrf.mxu0
  %v437 = vadd.f32 0.0, %v436
  %v438 = vpop.f32.mrf.mxu0
  %v439 = vadd.f32 0.0, %v438
  %440 = vmatmul.bf16.gmra.mxu0 %v222
  %v441 = vpop.f32.mrf.mxu0
  %v442 = vadd.f32 0.0, %v441
  %v443 = vpop.f32.mrf.mxu0
  %v444 = vadd.f32 0.0, %v443
  %445 = vmatmul.bf16.gmra.mxu0 %v223
  %v446 = vpop.f32.mrf.mxu0
  %v447 = vadd.f32 0.0, %v446
  %v448 = vpop.f32.mrf.mxu0
  %v449 = vadd.f32 0.0, %v448
  %450 = vmatmul.bf16.gmra.mxu0 %v224
  %v451 = vpop.f32.mrf.mxu0
  %v452 = vadd.f32 0.0, %v451
  %v453 = vpop.f32.mrf.mxu0
  %v454 = vadd.f32 0.0, %v453
  %455 = vmatmul.bf16.gmra.mxu0 %v225
  %v456 = vpop.f32.mrf.mxu0
  %v457 = vadd.f32 0.0, %v456
  %v458 = vpop.f32.mrf.mxu0
  %v459 = vadd.f32 0.0, %v458
  %460 = vmatmul.bf16.gmra.mxu0 %v226
  %v461 = vpop.f32.mrf.mxu0
  %v462 = vadd.f32 0.0, %v461
  %v463 = vpop.f32.mrf.mxu0
  %v464 = vadd.f32 0.0, %v463
  %465 = vmatmul.bf16.gmra.mxu0 %v227
  %v466 = vpop.f32.mrf.mxu0
  %v467 = vadd.f32 0.0, %v466
  %v468 = vpop.f32.mrf.mxu0
  %v469 = vadd.f32 0.0, %v468
  %470 = vdwg.mxu0
  %v471 = vpack.c.bf16 %v432, %v432
  %v472 = vpack.c.bf16 %v434, %v434
  %v473 = vpack.c.bf16 %v437, %v437
  %v474 = vpack.c.bf16 %v439, %v439
  %v475 = vpack.c.bf16 %v442, %v442
  %v476 = vpack.c.bf16 %v444, %v444
  %v477 = vpack.c.bf16 %v447, %v447
  %v478 = vpack.c.bf16 %v449, %v449
  %v479 = vpack.c.bf16 %v452, %v452
  %v480 = vpack.c.bf16 %v454, %v454
  %v481 = vpack.c.bf16 %v457, %v457
  %v482 = vpack.c.bf16 %v459, %v459
  %v483 = vpack.c.bf16 %v462, %v462
  %v484 = vpack.c.bf16 %v464, %v464
  %v485 = vpack.c.bf16 %v467, %v467
  %v486 = vpack.c.bf16 %v469, %v469
  %vm487 = vcmask 519168
  %488 = vst.msk [vmem:[%s4] sm:$0xf] %vm487, %v471
  %489 = vst.msk [vmem:[%s4 + $0x4] sm:$0xf] %vm487, %v472
  %490 = vst.msk [vmem:[%s4 + $0x8] sm:$0xf] %vm487, %v473
  %491 = vst.msk [vmem:[%s4 + $0xc] sm:$0xf] %vm487, %v474
  %492 = vst.msk [vmem:[%s4 + $0x10] sm:$0xf] %vm487, %v475
  %493 = vst.msk [vmem:[%s4 + $0x14] sm:$0xf] %vm487, %v476
  %494 = vst.msk [vmem:[%s4 + $0x18] sm:$0xf] %vm487, %v477
  %495 = vst.msk [vmem:[%s4 + $0x1c] sm:$0xf] %vm487, %v478
  %496 = vst.msk [vmem:[%s4 + $0x20] sm:$0xf] %vm487, %v479
  %497 = vst.msk [vmem:[%s4 + $0x24] sm:$0xf] %vm487, %v480
  %498 = vst.msk [vmem:[%s4 + $0x28] sm:$0xf] %vm487, %v481
  %499 = vst.msk [vmem:[%s4 + $0x2c] sm:$0xf] %vm487, %v482
  %500 = vst.msk [vmem:[%s4 + $0x30] sm:$0xf] %vm487, %v483
  %501 = vst.msk [vmem:[%s4 + $0x34] sm:$0xf] %vm487, %v484
  %502 = vst.msk [vmem:[%s4 + $0x38] sm:$0xf] %vm487, %v485
  %503 = vst.msk [vmem:[%s4 + $0x3c] sm:$0xf] %vm487, %v486
  // Predicated region
  $region18: #{mlgcn_forward.2} parent=0 // pred_check
    _
  $region19: #{mlgcn_forward.2} parent=0 // pred_check_branch
    %505 = sbr.rel (0) target = $region21
  $region20: #{mlgcn_forward.2} parent=0 // pred_region
    _
  $region21: #{mlgcn_forward.2} parent=0 // pred_fallthru
    _
  // Predicated region
  $region22: #{mlgcn_forward.2} parent=0 // pred_check
    _
  $region23: #{mlgcn_forward.2} parent=0 // pred_check_branch
    %507 = sbr.rel (0) target = $region25
  $region24: #{mlgcn_forward.2} parent=0 // pred_region
    _
  $region25: #{mlgcn_forward.2} parent=0 // pred_fallthru
    _

// kernel: mlgcn_forward.3
$region0: #{mlgcn_forward.3}
  #allocation0 [shape = 'u32[]', space=smem, size = 0x4, offset = 0x4, fixed_abs, tag = 'smem constant byte address 0x4 - core index']
  #allocation1 [shape = 'u32[72,128]{1,0:T(1,128)}', space=vmem, size = 0x9000, scoped, tag = 'internal scratch']
  %s0 = inlined_call_operand.vmem [shape: bf16[8,32], index: 0, kind: input, shape index: {}]
  %s1 = inlined_call_operand.vmem [shape: bf16[32,64], index: 1, kind: input, shape index: {}]
  %s2 = inlined_call_operand.vmem [shape: f32[1,64], index: 2, kind: input, shape index: {}]
  %s3 = inlined_call_operand.vmem [shape: bf16[64,64], index: 3, kind: input, shape index: {}]
  %s4 = inlined_call_operand.vmem [shape: f32[1,64], index: 4, kind: input, shape index: {}]
  %s5 = inlined_call_operand.vmem [shape: bf16[128,64], index: 5, kind: input, shape index: {}]
  %s6 = inlined_call_operand.hbm [shape: f32[8,128], index: 6, kind: output, shape index: {}]
  %s7 = sld [smem:[#allocation0]]
  $region34: #{mlgcn_forward.3} parent=0
    _
  %s9 = ssub.s32 1, %s7
  %s10 = scalar_select 0, %s9, %s7
  $region1: #{mlgcn_forward.3} parent=0
    #allocation2 [shape = 'u8[4096]{0}', space=vmem, size = 0x1000, scoped, tag = 'output window, operand 0, single buffered']
    #allocation3 [shape = 's32[1]{0}', space=sflag, size = 0x4, scoped, tag = 'scoped memory for mlgcn_forward.3']
    %11 = vsyncpa [#allocation3], 0
    // Predicated region
    $region2: #{mlgcn_forward.3} parent=1 // pred_check
      _
    $region3: #{mlgcn_forward.3} parent=1 // pred_check_branch
      %13 = sbr.rel (0) target = $region5
    $region4: #{mlgcn_forward.3} parent=1 // pred_region
      _
    $region5: #{mlgcn_forward.3} parent=1 // pred_fallthru
      _
    // Predicated region
    $region6: #{mlgcn_forward.3} parent=1 // pred_check
      _
    $region7: #{mlgcn_forward.3} parent=1 // pred_check_branch
      %15 = sbr.rel (0) target = $region9
    $region8: #{mlgcn_forward.3} parent=1 // pred_region
      _
    $region9: #{mlgcn_forward.3} parent=1 // pred_fallthru
      _
    // Predicated region
    $region10: #{mlgcn_forward.3} parent=1 // pred_check
      _
    $region11: #{mlgcn_forward.3} parent=1 // pred_check_branch
      %17 = sbr.rel (0) target = $region13
    $region12: #{mlgcn_forward.3} parent=1 // pred_region
      _
    $region13: #{mlgcn_forward.3} parent=1 // pred_fallthru
      _
    // Predicated region
    $region14: #{mlgcn_forward.3} parent=1 // pred_check
      _
    $region15: #{mlgcn_forward.3} parent=1 // pred_check_branch
      %19 = sbr.rel (0) target = $region17
    $region16: #{mlgcn_forward.3} parent=1 // pred_region
      _
    $region17: #{mlgcn_forward.3} parent=1 // pred_fallthru
      _
    // Predicated region
    $region18: #{mlgcn_forward.3} parent=1 // pred_check
      _
    $region19: #{mlgcn_forward.3} parent=1 // pred_check_branch
      %21 = sbr.rel (0) target = $region21
    $region20: #{mlgcn_forward.3} parent=1 // pred_region
      _
    $region21: #{mlgcn_forward.3} parent=1 // pred_fallthru
      _
    // Predicated region
    $region22: #{mlgcn_forward.3} parent=1 // pred_check
      _
    $region23: #{mlgcn_forward.3} parent=1 // pred_check_branch
      %23 = sbr.rel (0) target = $region25
    $region24: #{mlgcn_forward.3} parent=1 // pred_region
      _
    $region25: #{mlgcn_forward.3} parent=1 // pred_fallthru
      _
    %v25 = vld [vmem:[%s0] sm:$0xf]
    %v26 = vld [vmem:[%s1] sm:$0xf]
    %v27 = vld [vmem:[%s1 + $0x4] sm:$0xf]
    %v28 = vld [vmem:[%s1 + $0x8] sm:$0xf]
    %v29 = vld [vmem:[%s1 + $0xc] sm:$0xf]
    %v30 = vld [vmem:[%s2] sm:$0x1]
    %v32 = vperm.slane %v30, 0
    %v38 = vunpack.c.l.b16 %v26
    %v39 = vunpack.c.l.b16 %v27
    %v40 = vunpack.c.l.b16 %v28
    %v41 = vunpack.c.l.b16 %v29
    %v42 = vpack.c.b16 %v39, %v38
    %v43 = vpack.c.b16 %v41, %v40
    %vm46 = vcmask 261120
    %v48 = vsel %vm46, %v25, 0
    %50 = vmatpush.bf16.msra.mxu0 0
    %51 = vmatpush.bf16.msra.mxu0 0
    %52 = vmatpush.bf16.msra.mxu0 0
    %53 = vmatpush.bf16.msra.mxu0 0
    %54 = vmatpush.bf16.msra.mxu0 0
    %55 = vmatpush.bf16.msra.mxu0 0
    %56 = vmatpush.bf16.msra.mxu0 %v43
    %57 = vmatpush.bf16.msra.mxu0 %v42
    %58 = vmatmul.bf16.gmra.mxu0 %v48
    %v59 = vpop.f32.mrf.mxu0
    %v60 = vadd.f32 %v32, %v59
    %v61 = vpop.f32.mrf.mxu0
    %62 = vdwg.mxu0
    %v63 = vmax.f32 %v60, 0.0
    %v64 = vpack.c.bf16 %v63, %v63
    %v65 = vld [vmem:[%s3] sm:$0xf]
    %v66 = vld [vmem:[%s3 + $0x4] sm:$0xf]
    %v67 = vld [vmem:[%s3 + $0x8] sm:$0xf]
    %v68 = vld [vmem:[%s3 + $0xc] sm:$0xf]
    %v69 = vld [vmem:[%s3 + $0x10] sm:$0xf]
    %v70 = vld [vmem:[%s3 + $0x14] sm:$0xf]
    %v71 = vld [vmem:[%s3 + $0x18] sm:$0xf]
    %v72 = vld [vmem:[%s3 + $0x1c] sm:$0xf]
    %v73 = vld [vmem:[%s4] sm:$0x1]
    %v75 = vperm.slane %v73, 0
    %v85 = vunpack.c.l.b16 %v65
    %v86 = vunpack.c.l.b16 %v66
    %v87 = vunpack.c.l.b16 %v67
    %v88 = vunpack.c.l.b16 %v68
    %v89 = vunpack.c.l.b16 %v69
    %v90 = vunpack.c.l.b16 %v70
    %v91 = vunpack.c.l.b16 %v71
    %v92 = vunpack.c.l.b16 %v72
    %v93 = vpack.c.b16 %v86, %v85
    %v94 = vpack.c.b16 %v88, %v87
    %v95 = vpack.c.b16 %v90, %v89
    %v96 = vpack.c.b16 %v92, %v91
    %vm101 = vcmask 523264
    %v103 = vsel %vm101, %v64, 0
    %105 = vmatpush.bf16.msra.mxu0 0
    %106 = vmatpush.bf16.msra.mxu0 0
    %107 = vmatpush.bf16.msra.mxu0 0
    %108 = vmatpush.bf16.msra.mxu0 0
    %109 = vmatpush.bf16.msra.mxu0 %v96
    %110 = vmatpush.bf16.msra.mxu0 %v95
    %111 = vmatpush.bf16.msra.mxu0 %v94
    %112 = vmatpush.bf16.msra.mxu0 %v93
    %113 = vmatmul.bf16.gmra.mxu0 %v103
    %v114 = vpop.f32.mrf.mxu0
    %v115 = vadd.f32 %v75, %v114
    %v116 = vpop.f32.mrf.mxu0
    %117 = vdwg.mxu0
    %v118 = vpack.c.bf16 %v115, %v115
    %v119 = vld [vmem:[%s5] sm:$0xf]
    %v120 = vld [vmem:[%s5 + $0x4] sm:$0xf]
    %v121 = vld [vmem:[%s5 + $0x8] sm:$0xf]
    %v122 = vld [vmem:[%s5 + $0xc] sm:$0xf]
    %v123 = vld [vmem:[%s5 + $0x10] sm:$0xf]
    %v124 = vld [vmem:[%s5 + $0x14] sm:$0xf]
    %v125 = vld [vmem:[%s5 + $0x18] sm:$0xf]
    %v126 = vld [vmem:[%s5 + $0x1c] sm:$0xf]
    %v127 = vld [vmem:[%s5 + $0x20] sm:$0xf]
    %v128 = vld [vmem:[%s5 + $0x24] sm:$0xf]
    %v129 = vld [vmem:[%s5 + $0x28] sm:$0xf]
    %v130 = vld [vmem:[%s5 + $0x2c] sm:$0xf]
    %v131 = vld [vmem:[%s5 + $0x30] sm:$0xf]
    %v132 = vld [vmem:[%s5 + $0x34] sm:$0xf]
    %v133 = vld [vmem:[%s5 + $0x38] sm:$0xf]
    %v134 = vld [vmem:[%s5 + $0x3c] sm:$0xf]
    %v151 = vunpack.c.l.b16 %v119
    %v152 = vunpack.c.l.b16 %v120
    %v153 = vunpack.c.l.b16 %v121
    %v154 = vunpack.c.l.b16 %v122
    %v155 = vunpack.c.l.b16 %v123
    %v156 = vunpack.c.l.b16 %v124
    %v157 = vunpack.c.l.b16 %v125
    %v158 = vunpack.c.l.b16 %v126
    %v159 = vunpack.c.l.b16 %v127
    %v160 = vunpack.c.l.b16 %v128
    %v161 = vunpack.c.l.b16 %v129
    %v162 = vunpack.c.l.b16 %v130
    %v163 = vunpack.c.l.b16 %v131
    %v164 = vunpack.c.l.b16 %v132
    %v165 = vunpack.c.l.b16 %v133
    %v166 = vunpack.c.l.b16 %v134
    %v167 = vpack.c.b16 %v152, %v151
    %v168 = vpack.c.b16 %v154, %v153
    %v169 = vpack.c.b16 %v156, %v155
    %v170 = vpack.c.b16 %v158, %v157
    %v171 = vpack.c.b16 %v160, %v159
    %v172 = vpack.c.b16 %v162, %v161
    %v173 = vpack.c.b16 %v164, %v163
    %v174 = vpack.c.b16 %v166, %v165
    %v176 = vsel %vm101, %v118, 0
    %v179 = vsel %vm101, %v167, 0
    %v182 = vsel %vm101, %v168, 0
    %v185 = vsel %vm101, %v169, 0
    %v188 = vsel %vm101, %v170, 0
    %v191 = vsel %vm101, %v171, 0
    %v194 = vsel %vm101, %v172, 0
    %v197 = vsel %vm101, %v173, 0
    %v200 = vsel %vm101, %v174, 0
    %202 = vmatpush.bf16.xpose.msra.mxu0 %v200
    %203 = vmatpush.bf16.xpose.msra.mxu0 %v197
    %204 = vmatpush.bf16.xpose.msra.mxu0 %v194
    %205 = vmatpush.bf16.xpose.msra.mxu0 %v191
    %206 = vmatpush.bf16.xpose.msra.mxu0 %v188
    %207 = vmatpush.bf16.xpose.msra.mxu0 %v185
    %208 = vmatpush.bf16.xpose.msra.mxu0 %v182
    %209 = vmatpush.bf16.xpose.msra.mxu0 %v179
    %210 = vmatmul.bf16.gmra.mxu0 %v176
    %v211 = vpop.f32.mrf.mxu0
    %v212 = vadd.f32 0.0, %v211
    %v213 = vpop.f32.mrf.mxu0
    %214 = vdwg.mxu0
    %215 = vst [vmem:[#allocation2] sm:$0xff] %v212
    // Predicated region
    $region26: #{mlgcn_forward.3} parent=1 // pred_check
      _
    $region27: #{mlgcn_forward.3} parent=1 // pred_check_branch
      %217 = sbr.rel (0) target = $region29
    $region28: #{mlgcn_forward.3} parent=1 // pred_region
      %219 = vsyncadd [#allocation3], 0
      %s221 = sshll.u32 [#allocation2], 4
      %s222 = int_to_ptr.vmem [resolvable:$true] %s221
      %s223 = sshll.u32 %s6, 4
      %s224 = int_to_ptr.hbm [resolvable:$true] %s223
      %226 = dma.vmem_to_hbm [thread:$0]  %s222, 128, %s224, [#allocation3]
    $region29: #{mlgcn_forward.3} parent=1 // pred_fallthru
      _
    // Predicated region
    $region30: #{mlgcn_forward.3} parent=1 // pred_check
      _
    $region31: #{mlgcn_forward.3} parent=1 // pred_check_branch
      %228 = sbr.rel (0) target = $region33
    $region32: #{mlgcn_forward.3} parent=1 // pred_region
      %230 = dma.done [#allocation3], 128
    $region33: #{mlgcn_forward.3} parent=1 // pred_fallthru
      _
    %231 = vsyncpa [#allocation3], 1

</llo_original>
